<compile_context>
chip_gen: v7x
topology: tpu7x:2x2x1
jax: 0.10.0
libtpu: 0.0.40
codegen_flags: <defaults>
</compile_context>

<pallas_src>
import itertools
import numpy as np
import jax
import jax.numpy as jnp
from jax.experimental import pallas as pl
from jax.experimental.pallas import tpu as pltpu


def _round_up(x, m):
    return (x + m - 1) // m * m


# ---------------------------------------------------------------------------
# Pallas kernel: one fused MXU matmul per M tile.
#   out[i*tm:(i+1)*tm, :] = G_tile[tm, KCp] @ W[KCp, Coutp]
# bf16 inputs, f32 accumulation, lane-dense (Coutp % 128 == 0) output store.
# ---------------------------------------------------------------------------
def _fused_matmul_kernel(g_ref, w_ref, o_ref):
    o_ref[...] = jnp.dot(g_ref[...], w_ref[...],
                         preferred_element_type=jnp.float32)


def _pick_tm(M, KCp, Coutp, in_itemsize, budget_bytes=40 * 1024 * 1024):
    """Largest M tile that fits a conservative (v7x 64 MiB-safe) VMEM budget."""
    tm = 128
    for cand in (256, 512, 1024, 2048):
        need = (2 * cand * KCp * in_itemsize        # double-buffered gathered tile
                + 2 * cand * Coutp * 4              # double-buffered f32 output tile
                + 2 * KCp * Coutp * in_itemsize)    # resident weights
        if need <= budget_bytes:
            tm = cand
    tm = min(tm, max(128, _round_up(M, 128)))       # don't over-pad tiny problems
    if M > 256:                                     # keep >=2 tiles so both v7x TCs get work
        tm = min(tm, max(128, _round_up(-(-M // 2), 128)))
    return tm


def pallas_fused_matmul(g, w, *, tm):
    """g: [Mp, KCp], w: [KCp, Coutp] (same low-precision dtype) -> [Mp, Coutp] f32."""
    Mp, KCp = g.shape
    KCp2, Coutp = w.shape
    assert KCp == KCp2 and Mp % tm == 0 and KCp % 128 == 0 and Coutp % 128 == 0

    isz = g.dtype.itemsize
    need = 2 * tm * KCp * isz + 2 * tm * Coutp * 4 + 2 * KCp * Coutp * w.dtype.itemsize
    vmem_limit = int(min(max(need + (4 << 20), 32 << 20), 64 << 20))

    cost = pl.CostEstimate(
        flops=2 * Mp * KCp * Coutp,
        transcendentals=0,
        bytes_accessed=Mp * KCp * isz + KCp * Coutp * w.dtype.itemsize + Mp * Coutp * 4,
    )

    return pl.pallas_call(
        _fused_matmul_kernel,
        out_shape=jax.ShapeDtypeStruct((Mp, Coutp), jnp.float32),
        grid_spec=pltpu.PrefetchScalarGridSpec(
            num_scalar_prefetch=0,
            grid=(Mp // tm,),
            in_specs=[
                pl.BlockSpec((tm, KCp), lambda i: (i, 0)),
                pl.BlockSpec((KCp, Coutp), lambda i: (0, 0)),   # weights stay resident
            ],
            out_specs=pl.BlockSpec((tm, Coutp), lambda i: (i, 0)),
        ),
        compiler_params=pltpu.CompilerParams(
            dimension_semantics=("parallel",),
            vmem_limit_bytes=vmem_limit),
        cost_estimate=cost,
    )(g, w)


# ---------------------------------------------------------------------------
# Module equivalent
# ---------------------------------------------------------------------------
class CustomMinkowskiConvolutionTranspose:
    def __init__(self, kernel_size, stride, dilation, dimension,
                 compute_dtype=jnp.bfloat16):
        ks = np.broadcast_to(np.asarray(kernel_size, np.int32), (dimension,)).copy()
        st = np.broadcast_to(np.asarray(stride, np.int32), (dimension,)).copy()
        dl = np.broadcast_to(np.asarray(dilation, np.int32), (dimension,)).copy()
        self.kernel_size = ks
        self.stride = st
        self.dilation = dl
        self.dimension = dimension
        self.kernel_volume = int(np.prod(ks))
        self.use_mm = bool(np.prod(ks) == 1 and np.prod(st) == 1)
        self.compute_dtype = compute_dtype   # bf16 inputs, f32 MXU accumulation

        # Hypercube kernel region (MinkowskiEngine default). Odd kernels are
        # centered, even kernels start at 0.
        axes = []
        for d in range(dimension):
            k = int(ks[d])
            axes.append(range(-(k - 1) // 2, (k - 1) // 2 + 1) if k % 2 == 1
                        else range(0, k))
        self.offsets = np.array(list(itertools.product(*axes)), dtype=np.int32)  # [K, D]

    # -- vectorized kernel-map construction (no Python dict loops) ----------
    def _build_neighbor_map(self, in_coords, out_coords, off):
        N = in_coords.shape[0]
        M = out_coords.shape[0]
        K = off.shape[0]
        D = self.dimension
        # output j gathers input at (out_coord[j] - off[k]) via W[k]
        src = np.concatenate(
            [np.broadcast_to(out_coords[:, None, :1], (M, K, 1)),
             out_coords[:, None, 1:] - off[None, :, :]],
            axis=-1).reshape(-1, 1 + D)                         # [M*K, 1+D]
        allc = np.concatenate([in_coords, src], axis=0)
        _, inv = np.unique(allc, axis=0, return_inverse=True)
        inv = np.asarray(inv).reshape(-1)
        lut = np.full(int(inv.max()) + 1, N, dtype=np.int64)    # N == dummy zero row
        lut[inv[:N]] = np.arange(N)
        return lut[inv[N:]].reshape(M, K).astype(np.int32)

    def forward(self, kernel, in_feats, in_coords, out_coords=None):
        """kernel: [K, Cin, Cout] (or [Cin, Cout] for the 1x1/stride-1 path),
        in_feats: [N, Cin] f32, in_coords: [N, 1+D] int (batch, spatial).
        Returns (out_feats [M, Cout] f32, out_coords [M, 1+D])."""
        kernel = jnp.asarray(kernel, jnp.float32)
        in_feats = jnp.asarray(in_feats, jnp.float32)
        in_coords = np.asarray(in_coords, np.int32)
        N, Cin = in_feats.shape

        if self.use_mm and out_coords is None:
            # outfeat = input.F.mm(kernel); output coord map == input coord map
            if kernel.ndim == 3:
                kernel = kernel.reshape(kernel.shape[1], kernel.shape[2])
            W = kernel[None]                                   # [1, Cin, Cout]
            K = 1
            out_coords = in_coords
            gathered2d = in_feats                              # identity map
        else:
            if kernel.ndim == 2:
                kernel = kernel[None]
            W = kernel                                         # [K, Cin, Cout]
            K = self.kernel_volume
            off = self.offsets * self.dilation[None, :]        # out tensor_stride == 1

            if out_coords is None:
                # transpose conv generates out coords at tensor_stride=1:
                # every in_coord offset by every kernel offset, deduplicated.
                cand = (in_coords[:, None, 1:] + off[None, :, :]).reshape(-1, self.dimension)
                bcol = np.repeat(in_coords[:, :1], K, axis=0)
                out_coords = np.unique(np.concatenate([bcol, cand], axis=1), axis=0)
            out_coords = np.asarray(out_coords, np.int32)
            M = out_coords.shape[0]

            nbr = self._build_neighbor_map(in_coords, out_coords, off)   # [M, K]

            # gather once into the folded [M, K*Cin] layout (bf16 to halve traffic)
            f_pad = jnp.concatenate(
                [in_feats, jnp.zeros((1, Cin), jnp.float32)], axis=0
            ).astype(self.compute_dtype)                        # [N+1, Cin]
            gathered2d = jnp.take(f_pad, jnp.asarray(nbr), axis=0).reshape(M, K * Cin)

        M = gathered2d.shape[0]
        Cout = W.shape[-1]
        KC = K * Cin
        KCp = _round_up(KC, 128)          # pad MXU contraction to a lane multiple
        Coutp = _round_up(Cout, 128)      # lane-dense output (unmasked stores)

        W2d = jnp.pad(W.reshape(KC, Cout),
                      ((0, KCp - KC), (0, Coutp - Cout))).astype(self.compute_dtype)

        itemsize = jnp.dtype(self.compute_dtype).itemsize
        tm = _pick_tm(M, KCp, Coutp, itemsize)
        Mp = _round_up(max(M, 1), tm)
        g = jnp.pad(gathered2d.astype(self.compute_dtype),
                    ((0, Mp - M), (0, KCp - KC)))

        out = pallas_fused_matmul(g, W2d, tm=tm)[:M, :Cout]
        return out, out_coords


# ---------------------------------------------------------------------------
if __name__ == "__main__":
    key = jax.random.PRNGKey(0)
    k_perm, k_feat, k_w1, k_w2 = jax.random.split(key, 4)

    dimension = 2
    C_in, C_out = 16, 32
    kernel_size, stride, dilation = 3, 2, 1
    N = 48

    # sparse input at tensor_stride=2: batch of 2, spatial extent 16
    grid_pts = np.array(
        list(itertools.product(range(2), range(0, 16, stride), range(0, 16, stride))),
        dtype=np.int32)                                              # [128, 3]
    perm = np.asarray(jax.random.permutation(k_perm, grid_pts.shape[0]))
    coords = grid_pts[perm[:N]]                                      # [48, 3]
    feats = jax.random.normal(k_feat, (N, C_in), dtype=jnp.float32)  # [48, 16]

    # --- general sparse conv-transpose path (kernel_size=3, stride=2) -------
    conv = CustomMinkowskiConvolutionTranspose(kernel_size, stride, dilation, dimension)
    W = 0.1 * jax.random.normal(k_w1, (conv.kernel_volume, C_in, C_out), jnp.float32)
    out_feats, out_coords = conv.forward(W, feats, coords)
    out_feats = jax.block_until_ready(out_feats)

    # pure-numpy reference (scatter formulation) with bf16-quantized inputs,
    # f32 accumulation — matches the kernel's bf16-in / f32-acc numerics.
    feats_q = np.asarray(jnp.asarray(feats, jnp.bfloat16).astype(jnp.float32))
    W_q = np.asarray(jnp.asarray(W, jnp.bfloat16).astype(jnp.float32))
    off = conv.offsets * conv.dilation[None, :]
    out_map = {tuple(c): j for j, c in enumerate(out_coords.tolist())}
    ref = np.zeros((out_coords.shape[0], C_out), np.float32)
    for i, c in enumerate(coords.tolist()):
        for k in range(conv.kernel_volume):
            tgt = (c[0], c[1] + int(off[k, 0]), c[2] + int(off[k, 1]))
            ref[out_map[tgt]] += feats_q[i] @ W_q[k]
    np.testing.assert_allclose(np.asarray(out_feats), ref, rtol=1e-3, atol=1e-3)

    # --- use_mm path (kernel_size=1, stride=1): outfeat = F.mm(kernel) ------
    conv_mm = CustomMinkowskiConvolutionTranspose(1, 1, 1, dimension)
    W_mm = 0.1 * jax.random.normal(k_w2, (1, C_in, C_out), jnp.float32)
    out_mm, out_mm_coords = conv_mm.forward(W_mm, feats, coords)
    out_mm = jax.block_until_ready(out_mm)
    Wmm_q = np.asarray(jnp.asarray(W_mm[0], jnp.bfloat16).astype(jnp.float32))
    np.testing.assert_allclose(np.asarray(out_mm), feats_q @ Wmm_q,
                               rtol=1e-3, atol=1e-3)
    assert np.array_equal(out_mm_coords, coords)

    print("KERNEL_OK")
</pallas_src>

<mosaic_0001>
module attributes {stable_mosaic.version = 11 : i64} {
  func.func @_fused_matmul_kernel(%arg0: i32, %arg1: memref<256x256xbf16, #tpu.memory_space<vmem>>, %arg2: memref<256x128xbf16, #tpu.memory_space<vmem>>, %arg3: memref<256x128xf32, #tpu.memory_space<vmem>>) attributes {dimension_semantics = [#tpu.dimension_semantics<parallel>], iteration_bounds = array<i64: 2>, scalar_prefetch = 0 : i64, scratch_operands = 0 : i64, tpu.core_type = #tpu.core_type<tc>, window_params = [{transform_indices = @transform_0, window_bounds = array<i64: 256, 256>}, {pipeline_mode = #tpu.pipeline_mode<synchronous>, transform_indices = @transform_1, window_bounds = array<i64: 256, 128>}, {transform_indices = @transform_2, window_bounds = array<i64: 256, 128>}]} {
    %c0 = arith.constant 0 : index
    %c0_0 = arith.constant 0 : index
    %0 = vector.load %arg1[%c0, %c0_0] : memref<256x256xbf16, #tpu.memory_space<vmem>>, vector<256x256xbf16>
    %c0_1 = arith.constant 0 : index
    %c0_2 = arith.constant 0 : index
    %1 = vector.load %arg2[%c0_1, %c0_2] : memref<256x128xbf16, #tpu.memory_space<vmem>>, vector<256x128xbf16>
    %cst = arith.constant dense<0.000000e+00> : vector<256x128xf32>
    %2 = tpu.matmul %0, %1, %cst {dimension_numbers = #tpu.dot_dimension_numbers<[1], [0], [0], [1], [0, 0, 1, 1], [], []>} : vector<256x256xbf16>, vector<256x128xbf16>, vector<256x128xf32> -> vector<256x128xf32>
    %c0_3 = arith.constant 0 : index
    %c0_4 = arith.constant 0 : index
    %3 = vector.load %arg3[%c0_3, %c0_4] : memref<256x128xf32, #tpu.memory_space<vmem>>, vector<256x128xf32>
    tpu.vector_store %arg3[%c0_3, %c0_4], %2 {strides = array<i32>} : memref<256x128xf32, #tpu.memory_space<vmem>>, vector<256x128xf32>,
    return
  }
  func.func @transform_0(%arg0: i32) -> (i32, i32) {
    %c0_i32 = arith.constant 0 : i32
    %c0_i32_0 = arith.constant 0 : i32
    return %arg0, %c0_i32 : i32, i32
  }
  func.func @transform_1(%arg0: i32) -> (i32, i32) {
    %c0_i32 = arith.constant 0 : i32
    %c0_i32_0 = arith.constant 0 : i32
    %c0_i32_1 = arith.constant 0 : i32
    return %c0_i32, %c0_i32_0 : i32, i32
  }
  func.func @transform_2(%arg0: i32) -> (i32, i32) {
    %c0_i32 = arith.constant 0 : i32
    %c0_i32_0 = arith.constant 0 : i32
    return %arg0, %c0_i32 : i32, i32
  }
}

</mosaic_0001>

<llo_original>
// kernel: tpu_custom_call.1
$region0: #{tpu_custom_call.1}
  #allocation0 [shape = 'u32[]', space=smem, size = 0x4, offset = 0x4, fixed_abs, tag = 'smem constant byte address 0x4 - core index']
  #allocation1 [shape = 'u32[144,128]{1,0:T(1,128)}', space=vmem, size = 0x12000, scoped, tag = 'internal scratch']
  %s0 = inlined_call_operand.hbm [shape: bf16[512,256], index: 0, kind: input, shape index: {}]
  %s1 = inlined_call_operand.hbm [shape: bf16[256,128], index: 1, kind: input, shape index: {}]
  %s2 = inlined_call_operand.hbm [shape: f32[512,128], index: 2, kind: output, shape index: {}]
  %s3 = sld [smem:[#allocation0]]
  $region49: #{tpu_custom_call.1} parent=0
    _
  %s5 = ssub.s32 1, %s3
  %s6 = scalar_select 0, %s5, %s3
  $region1: #{tpu_custom_call.1} parent=0
    #allocation2 [shape = 'u8[262144]{0}', space=vmem, size = 0x40000, scoped, tag = 'input window, operand 0']
    #allocation3 [shape = 's32[2]{0}', space=sflag, size = 0x8, scoped, tag = 'scoped memory for tpu_custom_call.1']
    #allocation4 [shape = 's32[2]{0}', space=sflag, size = 0x8, scoped, tag = 'scoped memory for tpu_custom_call.1']
    #allocation5 [shape = 'u8[65536]{0}', space=vmem, size = 0x10000, scoped, tag = 'input window, operand 1, single buffered']
    #allocation6 [shape = 's32[1]{0}', space=sflag, size = 0x4, scoped, tag = 'scoped memory for tpu_custom_call.1']
    #allocation7 [shape = 'u8[262144]{0}', space=vmem, size = 0x40000, scoped, tag = 'output window, operand 0']
    %7 = vsyncpa [#allocation3], 0
    %s8 = scalar_lea.sflag [#allocation3], 1
    %9 = vsyncpa %s8, 0
    %10 = vsyncpa [#allocation6], 0
    %11 = vsyncpa [#allocation4], 0
    %s12 = scalar_lea.sflag [#allocation4], 1
    %13 = vsyncpa %s12, 0
    loop: start=0, step=1, limit=4
    $region2: #{tpu_custom_call.1} parent=1 // loop_pre_header
      _
    $region3: #{tpu_custom_call.1} parent=1 // loop_header
      %s15 = sphi 0, %s19
      %p16 = scmp.ge.s32.totalorder %s15, 4
      %s25 = sphi 0, %s27
      %s28 = sphi 0, %s25
      %s29 = sphi 0, %s28
      %s45 = sphi 0, %s29
      %s49 = sphi 0, %s49
      %s51 = sphi 0, %s49
      %s52 = sphi 0, %s51
      %s66 = sphi 0, %s52
      %s72 = sphi 0, %s74
      %s75 = sphi 0, %s72
      %s76 = sphi 0, %s75
      %s92 = sphi 0, %s76
    $region4: #{tpu_custom_call.1} parent=1 // loop_header_branch
      %18 = sbr.rel (%p16) target = $region8
    $region5: #{tpu_custom_call.1} parent=1 // loop_body
      %s20 = ssub.s32 %s15, 1
      %s21 = ssub.s32 %s15, 2
      %s22 = sadd.s32 %s15, 1
      %s23 = ssub.s32 %s15, %s22
      %p24 = scmp.eq.s32.totalorder %s23, 0
      %s26 = sadd.s32 %s25, 1
      %s27 = scalar_select %p24, %s25, %s26
      %p30 = pneg %p24
      %p31 = scmp.eq.s32.totalorder %s15, 1
      %p32 = por %p30, %p31
      %p33 = scmp.ne.s32.totalorder %s25, %s28
      %p34 = scmp.eq.s32.totalorder %s15, 0
      %p35 = por %p33, %p34
      %p36 = scmp.ne.s32.totalorder %s25, %s28
      %p37 = scmp.eq.s32.totalorder %s20, 1
      %p38 = por %p36, %p37
      %p39 = scmp.ne.s32.totalorder %s28, %s29
      %p40 = scmp.eq.s32.totalorder %s20, 0
      %p41 = por %p39, %p40
      %p42 = scmp.ne.s32.totalorder %s28, %s29
      %p43 = scmp.eq.s32.totalorder %s21, 1
      %p44 = por %p42, %p43
      %p46 = scmp.ne.s32.totalorder %s29, %s45
      %p47 = scmp.eq.s32.totalorder %s21, 0
      %p48 = por %p46, %p47
      %s50 = sadd.s32 %s49, 1
      %p53 = scmp.eq.s32.totalorder %s15, 1
      %p54 = scmp.ne.s32.totalorder %s49, %s51
      %p55 = scmp.eq.s32.totalorder %s15, 0
      %p56 = por %p54, %p55
      %p57 = scmp.ne.s32.totalorder %s49, %s51
      %p58 = scmp.eq.s32.totalorder %s20, 1
      %p59 = por %p57, %p58
      %p60 = scmp.ne.s32.totalorder %s51, %s52
      %p61 = scmp.eq.s32.totalorder %s20, 0
      %p62 = por %p60, %p61
      %p63 = scmp.ne.s32.totalorder %s51, %s52
      %p64 = scmp.eq.s32.totalorder %s21, 1
      %p65 = por %p63, %p64
      %p67 = scmp.ne.s32.totalorder %s52, %s66
      %p68 = scmp.eq.s32.totalorder %s21, 0
      %p69 = por %p67, %p68
      %s70 = ssub.s32 %s15, %s22
      %p71 = scmp.eq.s32.totalorder %s70, 0
      %s73 = sadd.s32 %s72, 1
      %s74 = scalar_select %p71, %s72, %s73
      %p77 = pneg %p71
      %p78 = scmp.eq.s32.totalorder %s15, 1
      %p79 = por %p77, %p78
      %p80 = scmp.ne.s32.totalorder %s72, %s75
      %p81 = scmp.eq.s32.totalorder %s15, 0
      %p82 = por %p80, %p81
      %p83 = scmp.ne.s32.totalorder %s72, %s75
      %p84 = scmp.eq.s32.totalorder %s20, 1
      %p85 = por %p83, %p84
      %p86 = scmp.ne.s32.totalorder %s75, %s76
      %p87 = scmp.eq.s32.totalorder %s20, 0
      %p88 = por %p86, %p87
      %p89 = scmp.ne.s32.totalorder %s75, %s76
      %p90 = scmp.eq.s32.totalorder %s21, 1
      %p91 = por %p89, %p90
      %p93 = scmp.ne.s32.totalorder %s76, %s92
      %p94 = scmp.eq.s32.totalorder %s21, 0
      %p95 = por %p93, %p94
      %p96 = scmp.le.s32.totalorder 1, %s15
      %p97 = scmp.lt.s32.totalorder %s15, 3
      %p98 = pnand %p96, %p97
      %p99 = pneg %p98
      // Predicated region
      $region9: #{tpu_custom_call.1} parent=5 // pred_check
        _
      $region10: #{tpu_custom_call.1} parent=5 // pred_check_branch
        %101 = sbr.rel (%p98) target = $region12
      $region11: #{tpu_custom_call.1} parent=5 // pred_region
        %s102 = ssub.s32 %s15, 1
        // Predicated region
        $region13: #{tpu_custom_call.1} parent=11 // pred_check
          %p103 = pneg %p62
        $region14: #{tpu_custom_call.1} parent=11 // pred_check_branch
          %105 = sbr.rel (%p103) target = $region16
        $region15: #{tpu_custom_call.1} parent=11 // pred_region
          %s107 = ssub.s32 2048, 2048
          %108 = vsyncadd [#allocation6], %s107
          %s109 = sshll.u32 [#allocation5], 4
          %s110 = int_to_ptr.vmem [resolvable:$true] %s109
          %115 = dma.hbm_to_vmem [thread:$0]  %s1, 2048, %s110, [#allocation6], 64, 64, 4
        $region16: #{tpu_custom_call.1} parent=11 // pred_fallthru
          _
      $region12: #{tpu_custom_call.1} parent=5 // pred_fallthru
        _
      %p116 = scmp.lt.s32.totalorder %s15, 2
      // Predicated region
      $region17: #{tpu_custom_call.1} parent=5 // pred_check
        %p117 = pneg %p116
      $region18: #{tpu_custom_call.1} parent=5 // pred_check_branch
        %119 = sbr.rel (%p117) target = $region20
      $region19: #{tpu_custom_call.1} parent=5 // pred_region
        // Predicated region
        $region21: #{tpu_custom_call.1} parent=19 // pred_check
          %p120 = pneg %p35
        $region22: #{tpu_custom_call.1} parent=19 // pred_check_branch
          %122 = sbr.rel (%p120) target = $region24
        $region23: #{tpu_custom_call.1} parent=19 // pred_region
          %s123 = sand.u32 %s25, 1
          %s124 = scalar_lea.sflag [#allocation3], %s123
          %s125 = sand.u32 %s25, 1
          %s126 = smul.addr %s125, 256
          %s127 = scalar_lea.vmem [#allocation2], %s126
          %s128 = smul.u32 32, %s15
          %s130 = ssub.s32 4096, 4096
          %131 = vsyncadd %s124, %s130
          %s132 = smul.addr %s128, 2
          %s133 = smul.addr %s132, 64
          %s134 = scalar_lea.hbm %s0, %s133
          %s135 = sshll.u32 %s127, 4
          %s136 = int_to_ptr.vmem [resolvable:$true] %s135
          %141 = dma.hbm_to_vmem [thread:$0]  %s134, 4096, %s136, %s124, 128, 128, 8
        $region24: #{tpu_custom_call.1} parent=19 // pred_fallthru
          _
      $region20: #{tpu_custom_call.1} parent=5 // pred_fallthru
        _
      %p142 = scmp.le.s32.totalorder 1, %s15
      %p143 = scmp.lt.s32.totalorder %s15, 3
      %p144 = pnand %p142, %p143
      %p145 = pneg %p144
      // Predicated region
      $region25: #{tpu_custom_call.1} parent=5 // pred_check
        _
      $region26: #{tpu_custom_call.1} parent=5 // pred_check_branch
        %147 = sbr.rel (%p144) target = $region28
      $region27: #{tpu_custom_call.1} parent=5 // pred_region
        %s148 = ssub.s32 %s15, 1
        %s149 = sand.u32 %s28, 1
        %s150 = scalar_lea.sflag [#allocation3], %s149
        %s151 = sand.u32 %s28, 1
        %s152 = smul.addr %s151, 256
        %s153 = scalar_lea.vmem [#allocation2], %s152
        // Predicated region
        $region29: #{tpu_custom_call.1} parent=27 // pred_check
          %p154 = pneg %p41
        $region30: #{tpu_custom_call.1} parent=27 // pred_check_branch
          %156 = sbr.rel (%p154) target = $region32
        $region31: #{tpu_custom_call.1} parent=27 // pred_region
          %157 = dma.done %s150, 4096
        $region32: #{tpu_custom_call.1} parent=27 // pred_fallthru
          _
        // Predicated region
        $region33: #{tpu_custom_call.1} parent=27 // pred_check
          %p158 = pneg %p62
        $region34: #{tpu_custom_call.1} parent=27 // pred_check_branch
          %160 = sbr.rel (%p158) target = $region36
        $region35: #{tpu_custom_call.1} parent=27 // pred_region
          %161 = dma.done [#allocation6], 2048
        $region36: #{tpu_custom_call.1} parent=27 // pred_fallthru
          _
        %s162 = sand.u32 %s28, 1
        %s163 = scalar_lea.sflag [#allocation3], %s162
        %s164 = sand.u32 %s28, 1
        %s165 = smul.addr %s164, 256
        %s166 = scalar_lea.vmem [#allocation2], %s165
        %p167 = pneg %p41
        %p168 = pneg %p38
        %p169 = pneg %p62
        %p170 = pneg %p59
        %p171 = pneg %p88
        %p172 = pneg %p85
        %s173 = sand.u32 %s75, 1
        %s174 = scalar_lea.sflag [#allocation4], %s173
        %s175 = sand.u32 %s75, 1
        %s176 = smul.addr %s175, 256
        %s177 = scalar_lea.vmem [#allocation7], %s176
        %s178 = smul.u32 32, %s20
        %s179 = smul.u32 32, %s20
        %v181 = vld [vmem:[%s153] sm:$0xff]
        %v182 = vld [vmem:[%s153 + $0x8] sm:$0xff]
        %v183 = vld [vmem:[%s153 + $0x10] sm:$0xff]
        %v184 = vld [vmem:[%s153 + $0x18] sm:$0xff]
        %v185 = vld [vmem:[%s153 + $0x20] sm:$0xff]
        %v186 = vld [vmem:[%s153 + $0x28] sm:$0xff]
        %v187 = vld [vmem:[%s153 + $0x30] sm:$0xff]
        %v188 = vld [vmem:[%s153 + $0x38] sm:$0xff]
        %v189 = vld [vmem:[%s153 + $0x40] sm:$0xff]
        %v190 = vld [vmem:[%s153 + $0x48] sm:$0xff]
        %v191 = vld [vmem:[%s153 + $0x50] sm:$0xff]
        %v192 = vld [vmem:[%s153 + $0x58] sm:$0xff]
        %v193 = vld [vmem:[%s153 + $0x60] sm:$0xff]
        %v194 = vld [vmem:[%s153 + $0x68] sm:$0xff]
        %v195 = vld [vmem:[%s153 + $0x70] sm:$0xff]
        %v196 = vld [vmem:[%s153 + $0x78] sm:$0xff]
        %v197 = vld [vmem:[%s153 + $0x80] sm:$0xff]
        %v198 = vld [vmem:[%s153 + $0x88] sm:$0xff]
        %v199 = vld [vmem:[%s153 + $0x90] sm:$0xff]
        %v200 = vld [vmem:[%s153 + $0x98] sm:$0xff]
        %v201 = vld [vmem:[%s153 + $0xa0] sm:$0xff]
        %v202 = vld [vmem:[%s153 + $0xa8] sm:$0xff]
        %v203 = vld [vmem:[%s153 + $0xb0] sm:$0xff]
        %v204 = vld [vmem:[%s153 + $0xb8] sm:$0xff]
        %v205 = vld [vmem:[%s153 + $0xc0] sm:$0xff]
        %v206 = vld [vmem:[%s153 + $0xc8] sm:$0xff]
        %v207 = vld [vmem:[%s153 + $0xd0] sm:$0xff]
        %v208 = vld [vmem:[%s153 + $0xd8] sm:$0xff]
        %v209 = vld [vmem:[%s153 + $0xe0] sm:$0xff]
        %v210 = vld [vmem:[%s153 + $0xe8] sm:$0xff]
        %v211 = vld [vmem:[%s153 + $0xf0] sm:$0xff]
        %v212 = vld [vmem:[%s153 + $0xf8] sm:$0xff]
        %v213 = vld [vmem:[#allocation5] sm:$0xf]
        %v214 = vld [vmem:[#allocation5 + $0x4] sm:$0xf]
        %v215 = vld [vmem:[#allocation5 + $0x8] sm:$0xf]
        %v216 = vld [vmem:[#allocation5 + $0xc] sm:$0xf]
        %v217 = vld [vmem:[#allocation5 + $0x10] sm:$0xf]
        %v218 = vld [vmem:[#allocation5 + $0x14] sm:$0xf]
        %v219 = vld [vmem:[#allocation5 + $0x18] sm:$0xf]
        %v220 = vld [vmem:[#allocation5 + $0x1c] sm:$0xf]
        %v221 = vld [vmem:[#allocation5 + $0x20] sm:$0xf]
        %v222 = vld [vmem:[#allocation5 + $0x24] sm:$0xf]
        %v223 = vld [vmem:[#allocation5 + $0x28] sm:$0xf]
        %v224 = vld [vmem:[#allocation5 + $0x2c] sm:$0xf]
        %v225 = vld [vmem:[#allocation5 + $0x30] sm:$0xf]
        %v226 = vld [vmem:[#allocation5 + $0x34] sm:$0xf]
        %v227 = vld [vmem:[#allocation5 + $0x38] sm:$0xf]
        %v228 = vld [vmem:[#allocation5 + $0x3c] sm:$0xf]
        %v229 = vld [vmem:[#allocation5 + $0x40] sm:$0xf]
        %v230 = vld [vmem:[#allocation5 + $0x44] sm:$0xf]
        %v231 = vld [vmem:[#allocation5 + $0x48] sm:$0xf]
        %v232 = vld [vmem:[#allocation5 + $0x4c] sm:$0xf]
        %v233 = vld [vmem:[#allocation5 + $0x50] sm:$0xf]
        %v234 = vld [vmem:[#allocation5 + $0x54] sm:$0xf]
        %v235 = vld [vmem:[#allocation5 + $0x58] sm:$0xf]
        %v236 = vld [vmem:[#allocation5 + $0x5c] sm:$0xf]
        %v237 = vld [vmem:[#allocation5 + $0x60] sm:$0xf]
        %v238 = vld [vmem:[#allocation5 + $0x64] sm:$0xf]
        %v239 = vld [vmem:[#allocation5 + $0x68] sm:$0xf]
        %v240 = vld [vmem:[#allocation5 + $0x6c] sm:$0xf]
        %v241 = vld [vmem:[#allocation5 + $0x70] sm:$0xf]
        %v242 = vld [vmem:[#allocation5 + $0x74] sm:$0xf]
        %v243 = vld [vmem:[#allocation5 + $0x78] sm:$0xf]
        %v244 = vld [vmem:[#allocation5 + $0x7c] sm:$0xf]
        %v277 = vunpack.c.l.b16 %v181
        %v278 = vunpack.c.h.b16 %v181
        %v279 = vunpack.c.l.b16 %v182
        %v280 = vunpack.c.h.b16 %v182
        %v281 = vunpack.c.l.b16 %v183
        %v282 = vunpack.c.h.b16 %v183
        %v283 = vunpack.c.l.b16 %v184
        %v284 = vunpack.c.h.b16 %v184
        %v285 = vunpack.c.l.b16 %v185
        %v286 = vunpack.c.h.b16 %v185
        %v287 = vunpack.c.l.b16 %v186
        %v288 = vunpack.c.h.b16 %v186
        %v289 = vunpack.c.l.b16 %v187
        %v290 = vunpack.c.h.b16 %v187
        %v291 = vunpack.c.l.b16 %v188
        %v292 = vunpack.c.h.b16 %v188
        %v293 = vunpack.c.l.b16 %v189
        %v294 = vunpack.c.h.b16 %v189
        %v295 = vunpack.c.l.b16 %v190
        %v296 = vunpack.c.h.b16 %v190
        %v297 = vunpack.c.l.b16 %v191
        %v298 = vunpack.c.h.b16 %v191
        %v299 = vunpack.c.l.b16 %v192
        %v300 = vunpack.c.h.b16 %v192
        %v301 = vunpack.c.l.b16 %v193
        %v302 = vunpack.c.h.b16 %v193
        %v303 = vunpack.c.l.b16 %v194
        %v304 = vunpack.c.h.b16 %v194
        %v305 = vunpack.c.l.b16 %v195
        %v306 = vunpack.c.h.b16 %v195
        %v307 = vunpack.c.l.b16 %v196
        %v308 = vunpack.c.h.b16 %v196
        %v309 = vunpack.c.l.b16 %v197
        %v310 = vunpack.c.h.b16 %v197
        %v311 = vunpack.c.l.b16 %v198
        %v312 = vunpack.c.h.b16 %v198
        %v313 = vunpack.c.l.b16 %v199
        %v314 = vunpack.c.h.b16 %v199
        %v315 = vunpack.c.l.b16 %v200
        %v316 = vunpack.c.h.b16 %v200
        %v317 = vunpack.c.l.b16 %v201
        %v318 = vunpack.c.h.b16 %v201
        %v319 = vunpack.c.l.b16 %v202
        %v320 = vunpack.c.h.b16 %v202
        %v321 = vunpack.c.l.b16 %v203
        %v322 = vunpack.c.h.b16 %v203
        %v323 = vunpack.c.l.b16 %v204
        %v324 = vunpack.c.h.b16 %v204
        %v325 = vunpack.c.l.b16 %v205
        %v326 = vunpack.c.h.b16 %v205
        %v327 = vunpack.c.l.b16 %v206
        %v328 = vunpack.c.h.b16 %v206
        %v329 = vunpack.c.l.b16 %v207
        %v330 = vunpack.c.h.b16 %v207
        %v331 = vunpack.c.l.b16 %v208
        %v332 = vunpack.c.h.b16 %v208
        %v333 = vunpack.c.l.b16 %v209
        %v334 = vunpack.c.h.b16 %v209
        %v335 = vunpack.c.l.b16 %v210
        %v336 = vunpack.c.h.b16 %v210
        %v337 = vunpack.c.l.b16 %v211
        %v338 = vunpack.c.h.b16 %v211
        %v339 = vunpack.c.l.b16 %v212
        %v340 = vunpack.c.h.b16 %v212
        %v341 = vpack.c.b16 %v279, %v277
        %v342 = vpack.c.b16 %v280, %v278
        %v343 = vpack.c.b16 %v283, %v281
        %v344 = vpack.c.b16 %v284, %v282
        %v345 = vpack.c.b16 %v287, %v285
        %v346 = vpack.c.b16 %v288, %v286
        %v347 = vpack.c.b16 %v291, %v289
        %v348 = vpack.c.b16 %v292, %v290
        %v349 = vpack.c.b16 %v295, %v293
        %v350 = vpack.c.b16 %v296, %v294
        %v351 = vpack.c.b16 %v299, %v297
        %v352 = vpack.c.b16 %v300, %v298
        %v353 = vpack.c.b16 %v303, %v301
        %v354 = vpack.c.b16 %v304, %v302
        %v355 = vpack.c.b16 %v307, %v305
        %v356 = vpack.c.b16 %v308, %v306
        %v357 = vpack.c.b16 %v311, %v309
        %v358 = vpack.c.b16 %v312, %v310
        %v359 = vpack.c.b16 %v315, %v313
        %v360 = vpack.c.b16 %v316, %v314
        %v361 = vpack.c.b16 %v319, %v317
        %v362 = vpack.c.b16 %v320, %v318
        %v363 = vpack.c.b16 %v323, %v321
        %v364 = vpack.c.b16 %v324, %v322
        %v365 = vpack.c.b16 %v327, %v325
        %v366 = vpack.c.b16 %v328, %v326
        %v367 = vpack.c.b16 %v331, %v329
        %v368 = vpack.c.b16 %v332, %v330
        %v369 = vpack.c.b16 %v335, %v333
        %v370 = vpack.c.b16 %v336, %v334
        %v371 = vpack.c.b16 %v339, %v337
        %v372 = vpack.c.b16 %v340, %v338
        %v437 = vunpack.c.l.b16 %v213
        %v438 = vunpack.c.l.b16 %v214
        %v439 = vunpack.c.l.b16 %v215
        %v440 = vunpack.c.l.b16 %v216
        %v441 = vunpack.c.l.b16 %v217
        %v442 = vunpack.c.l.b16 %v218
        %v443 = vunpack.c.l.b16 %v219
        %v444 = vunpack.c.l.b16 %v220
        %v445 = vunpack.c.l.b16 %v221
        %v446 = vunpack.c.l.b16 %v222
        %v447 = vunpack.c.l.b16 %v223
        %v448 = vunpack.c.l.b16 %v224
        %v449 = vunpack.c.l.b16 %v225
        %v450 = vunpack.c.l.b16 %v226
        %v451 = vunpack.c.l.b16 %v227
        %v452 = vunpack.c.l.b16 %v228
        %v453 = vunpack.c.l.b16 %v229
        %v454 = vunpack.c.l.b16 %v230
        %v455 = vunpack.c.l.b16 %v231
        %v456 = vunpack.c.l.b16 %v232
        %v457 = vunpack.c.l.b16 %v233
        %v458 = vunpack.c.l.b16 %v234
        %v459 = vunpack.c.l.b16 %v235
        %v460 = vunpack.c.l.b16 %v236
        %v461 = vunpack.c.l.b16 %v237
        %v462 = vunpack.c.l.b16 %v238
        %v463 = vunpack.c.l.b16 %v239
        %v464 = vunpack.c.l.b16 %v240
        %v465 = vunpack.c.l.b16 %v241
        %v466 = vunpack.c.l.b16 %v242
        %v467 = vunpack.c.l.b16 %v243
        %v468 = vunpack.c.l.b16 %v244
        %v469 = vpack.c.b16 %v438, %v437
        %v470 = vpack.c.b16 %v440, %v439
        %v471 = vpack.c.b16 %v442, %v441
        %v472 = vpack.c.b16 %v444, %v443
        %v473 = vpack.c.b16 %v446, %v445
        %v474 = vpack.c.b16 %v448, %v447
        %v475 = vpack.c.b16 %v450, %v449
        %v476 = vpack.c.b16 %v452, %v451
        %v477 = vpack.c.b16 %v454, %v453
        %v478 = vpack.c.b16 %v456, %v455
        %v479 = vpack.c.b16 %v458, %v457
        %v480 = vpack.c.b16 %v460, %v459
        %v481 = vpack.c.b16 %v462, %v461
        %v482 = vpack.c.b16 %v464, %v463
        %v483 = vpack.c.b16 %v466, %v465
        %v484 = vpack.c.b16 %v468, %v467
        %501 = vmatprep.subr.bf16.mxu0 0
        %502 = vmatpush1.bf16.msra.mxu0 %v469
        %503 = vmatprep.subr.bf16.mxu0 0
        %504 = vmatpush1.bf16.msra.mxu0 %v470
        %505 = vmatprep.subr.bf16.mxu0 0
        %506 = vmatpush1.bf16.msra.mxu0 %v471
        %507 = vmatprep.subr.bf16.mxu0 0
        %508 = vmatpush1.bf16.msra.mxu0 %v472
        %509 = vmatprep.subr.bf16.mxu0 0
        %510 = vmatpush1.bf16.msra.mxu0 %v473
        %511 = vmatprep.subr.bf16.mxu0 0
        %512 = vmatpush1.bf16.msra.mxu0 %v474
        %513 = vmatprep.subr.bf16.mxu0 0
        %514 = vmatpush1.bf16.msra.mxu0 %v475
        %515 = vmatprep.subr.bf16.mxu0 0
        %516 = vmatpush1.bf16.msra.mxu0 %v476
        %517 = vmatprep.subr.bf16.mxu0 0
        %518 = vmatpush1.bf16.msra.mxu0 %v477
        %519 = vmatprep.subr.bf16.mxu0 0
        %520 = vmatpush1.bf16.msra.mxu0 %v478
        %521 = vmatprep.subr.bf16.mxu0 0
        %522 = vmatpush1.bf16.msra.mxu0 %v479
        %523 = vmatprep.subr.bf16.mxu0 0
        %524 = vmatpush1.bf16.msra.mxu0 %v480
        %525 = vmatprep.subr.bf16.mxu0 0
        %526 = vmatpush1.bf16.msra.mxu0 %v481
        %527 = vmatprep.subr.bf16.mxu0 0
        %528 = vmatpush1.bf16.msra.mxu0 %v482
        %529 = vmatprep.subr.bf16.mxu0 0
        %530 = vmatpush1.bf16.msra.mxu0 %v483
        %531 = vmatprep.subr.bf16.mxu0 0
        %532 = vmatpush1.bf16.msra.mxu0 %v484
        %533 = vmatprep.mubr.bf16.mxu0 %v342
        %534 = vmatmul.mubr.bf16.gmra.mrb[0].mxu0 %v341
        %v535 = vpop.f32.mrb[0].mxu0
        %v536 = vadd.f32 0.0, %v535
        %v537 = vpop.f32.mrb[0].mxu0
        %v538 = vpop.f32.mrb[0].mxu0
        %v539 = vadd.f32 0.0, %v538
        %v540 = vpop.f32.mrb[0].mxu0
        %541 = vmatprep.mubr.bf16.mxu0 %v344
        %542 = vmatmul.mubr.bf16.gmra.mrb[0].mxu0 %v343
        %v543 = vpop.f32.mrb[0].mxu0
        %v544 = vadd.f32 0.0, %v543
        %v545 = vpop.f32.mrb[0].mxu0
        %v546 = vpop.f32.mrb[0].mxu0
        %v547 = vadd.f32 0.0, %v546
        %v548 = vpop.f32.mrb[0].mxu0
        %549 = vmatprep.mubr.bf16.mxu0 %v346
        %550 = vmatmul.mubr.bf16.gmra.mrb[0].mxu0 %v345
        %v551 = vpop.f32.mrb[0].mxu0
        %v552 = vadd.f32 0.0, %v551
        %v553 = vpop.f32.mrb[0].mxu0
        %v554 = vpop.f32.mrb[0].mxu0
        %v555 = vadd.f32 0.0, %v554
        %v556 = vpop.f32.mrb[0].mxu0
        %557 = vmatprep.mubr.bf16.mxu0 %v348
        %558 = vmatmul.mubr.bf16.gmra.mrb[0].mxu0 %v347
        %v559 = vpop.f32.mrb[0].mxu0
        %v560 = vadd.f32 0.0, %v559
        %v561 = vpop.f32.mrb[0].mxu0
        %v562 = vpop.f32.mrb[0].mxu0
        %v563 = vadd.f32 0.0, %v562
        %v564 = vpop.f32.mrb[0].mxu0
        %565 = vmatprep.mubr.bf16.mxu0 %v350
        %566 = vmatmul.mubr.bf16.gmra.mrb[0].mxu0 %v349
        %v567 = vpop.f32.mrb[0].mxu0
        %v568 = vadd.f32 0.0, %v567
        %v569 = vpop.f32.mrb[0].mxu0
        %v570 = vpop.f32.mrb[0].mxu0
        %v571 = vadd.f32 0.0, %v570
        %v572 = vpop.f32.mrb[0].mxu0
        %573 = vmatprep.mubr.bf16.mxu0 %v352
        %574 = vmatmul.mubr.bf16.gmra.mrb[0].mxu0 %v351
        %v575 = vpop.f32.mrb[0].mxu0
        %v576 = vadd.f32 0.0, %v575
        %v577 = vpop.f32.mrb[0].mxu0
        %v578 = vpop.f32.mrb[0].mxu0
        %v579 = vadd.f32 0.0, %v578
        %v580 = vpop.f32.mrb[0].mxu0
        %581 = vmatprep.mubr.bf16.mxu0 %v354
        %582 = vmatmul.mubr.bf16.gmra.mrb[0].mxu0 %v353
        %v583 = vpop.f32.mrb[0].mxu0
        %v584 = vadd.f32 0.0, %v583
        %v585 = vpop.f32.mrb[0].mxu0
        %v586 = vpop.f32.mrb[0].mxu0
        %v587 = vadd.f32 0.0, %v586
        %v588 = vpop.f32.mrb[0].mxu0
        %589 = vmatprep.mubr.bf16.mxu0 %v356
        %590 = vmatmul.mubr.bf16.gmra.mrb[0].mxu0 %v355
        %v591 = vpop.f32.mrb[0].mxu0
        %v592 = vadd.f32 0.0, %v591
        %v593 = vpop.f32.mrb[0].mxu0
        %v594 = vpop.f32.mrb[0].mxu0
        %v595 = vadd.f32 0.0, %v594
        %v596 = vpop.f32.mrb[0].mxu0
        %597 = vmatprep.mubr.bf16.mxu0 %v358
        %598 = vmatmul.mubr.bf16.gmra.mrb[0].mxu0 %v357
        %v599 = vpop.f32.mrb[0].mxu0
        %v600 = vadd.f32 0.0, %v599
        %v601 = vpop.f32.mrb[0].mxu0
        %v602 = vpop.f32.mrb[0].mxu0
        %v603 = vadd.f32 0.0, %v602
        %v604 = vpop.f32.mrb[0].mxu0
        %605 = vmatprep.mubr.bf16.mxu0 %v360
        %606 = vmatmul.mubr.bf16.gmra.mrb[0].mxu0 %v359
        %v607 = vpop.f32.mrb[0].mxu0
        %v608 = vadd.f32 0.0, %v607
        %v609 = vpop.f32.mrb[0].mxu0
        %v610 = vpop.f32.mrb[0].mxu0
        %v611 = vadd.f32 0.0, %v610
        %v612 = vpop.f32.mrb[0].mxu0
        %613 = vmatprep.mubr.bf16.mxu0 %v362
        %614 = vmatmul.mubr.bf16.gmra.mrb[0].mxu0 %v361
        %v615 = vpop.f32.mrb[0].mxu0
        %v616 = vadd.f32 0.0, %v615
        %v617 = vpop.f32.mrb[0].mxu0
        %v618 = vpop.f32.mrb[0].mxu0
        %v619 = vadd.f32 0.0, %v618
        %v620 = vpop.f32.mrb[0].mxu0
        %621 = vmatprep.mubr.bf16.mxu0 %v364
        %622 = vmatmul.mubr.bf16.gmra.mrb[0].mxu0 %v363
        %v623 = vpop.f32.mrb[0].mxu0
        %v624 = vadd.f32 0.0, %v623
        %v625 = vpop.f32.mrb[0].mxu0
        %v626 = vpop.f32.mrb[0].mxu0
        %v627 = vadd.f32 0.0, %v626
        %v628 = vpop.f32.mrb[0].mxu0
        %629 = vmatprep.mubr.bf16.mxu0 %v366
        %630 = vmatmul.mubr.bf16.gmra.mrb[0].mxu0 %v365
        %v631 = vpop.f32.mrb[0].mxu0
        %v632 = vadd.f32 0.0, %v631
        %v633 = vpop.f32.mrb[0].mxu0
        %v634 = vpop.f32.mrb[0].mxu0
        %v635 = vadd.f32 0.0, %v634
        %v636 = vpop.f32.mrb[0].mxu0
        %637 = vmatprep.mubr.bf16.mxu0 %v368
        %638 = vmatmul.mubr.bf16.gmra.mrb[0].mxu0 %v367
        %v639 = vpop.f32.mrb[0].mxu0
        %v640 = vadd.f32 0.0, %v639
        %v641 = vpop.f32.mrb[0].mxu0
        %v642 = vpop.f32.mrb[0].mxu0
        %v643 = vadd.f32 0.0, %v642
        %v644 = vpop.f32.mrb[0].mxu0
        %645 = vmatprep.mubr.bf16.mxu0 %v370
        %646 = vmatmul.mubr.bf16.gmra.mrb[0].mxu0 %v369
        %v647 = vpop.f32.mrb[0].mxu0
        %v648 = vadd.f32 0.0, %v647
        %v649 = vpop.f32.mrb[0].mxu0
        %v650 = vpop.f32.mrb[0].mxu0
        %v651 = vadd.f32 0.0, %v650
        %v652 = vpop.f32.mrb[0].mxu0
        %653 = vmatprep.mubr.bf16.mxu0 %v372
        %654 = vmatmul.mubr.bf16.gmra.mrb[0].mxu0 %v371
        %v655 = vpop.f32.mrb[0].mxu0
        %v656 = vadd.f32 0.0, %v655
        %v657 = vpop.f32.mrb[0].mxu0
        %v658 = vpop.f32.mrb[0].mxu0
        %v659 = vadd.f32 0.0, %v658
        %v660 = vpop.f32.mrb[0].mxu0
        %661 = vdwg.mxu0
        %662 = vst [vmem:[%s177] sm:$0xff] %v536
        %663 = vst [vmem:[%s177 + $0x8] sm:$0xff] %v539
        %664 = vst [vmem:[%s177 + $0x10] sm:$0xff] %v544
        %665 = vst [vmem:[%s177 + $0x18] sm:$0xff] %v547
        %666 = vst [vmem:[%s177 + $0x20] sm:$0xff] %v552
        %667 = vst [vmem:[%s177 + $0x28] sm:$0xff] %v555
        %668 = vst [vmem:[%s177 + $0x30] sm:$0xff] %v560
        %669 = vst [vmem:[%s177 + $0x38] sm:$0xff] %v563
        %670 = vst [vmem:[%s177 + $0x40] sm:$0xff] %v568
        %671 = vst [vmem:[%s177 + $0x48] sm:$0xff] %v571
        %672 = vst [vmem:[%s177 + $0x50] sm:$0xff] %v576
        %673 = vst [vmem:[%s177 + $0x58] sm:$0xff] %v579
        %674 = vst [vmem:[%s177 + $0x60] sm:$0xff] %v584
        %675 = vst [vmem:[%s177 + $0x68] sm:$0xff] %v587
        %676 = vst [vmem:[%s177 + $0x70] sm:$0xff] %v592
        %677 = vst [vmem:[%s177 + $0x78] sm:$0xff] %v595
        %678 = vst [vmem:[%s177 + $0x80] sm:$0xff] %v600
        %679 = vst [vmem:[%s177 + $0x88] sm:$0xff] %v603
        %680 = vst [vmem:[%s177 + $0x90] sm:$0xff] %v608
        %681 = vst [vmem:[%s177 + $0x98] sm:$0xff] %v611
        %682 = vst [vmem:[%s177 + $0xa0] sm:$0xff] %v616
        %683 = vst [vmem:[%s177 + $0xa8] sm:$0xff] %v619
        %684 = vst [vmem:[%s177 + $0xb0] sm:$0xff] %v624
        %685 = vst [vmem:[%s177 + $0xb8] sm:$0xff] %v627
        %686 = vst [vmem:[%s177 + $0xc0] sm:$0xff] %v632
        %687 = vst [vmem:[%s177 + $0xc8] sm:$0xff] %v635
        %688 = vst [vmem:[%s177 + $0xd0] sm:$0xff] %v640
        %689 = vst [vmem:[%s177 + $0xd8] sm:$0xff] %v643
        %690 = vst [vmem:[%s177 + $0xe0] sm:$0xff] %v648
        %691 = vst [vmem:[%s177 + $0xe8] sm:$0xff] %v651
        %692 = vst [vmem:[%s177 + $0xf0] sm:$0xff] %v656
        %693 = vst [vmem:[%s177 + $0xf8] sm:$0xff] %v659
        %s694 = sand.u32 %s75, 1
        %s695 = scalar_lea.sflag [#allocation4], %s694
        %s696 = sand.u32 %s75, 1
        %s697 = smul.addr %s696, 256
        %s698 = scalar_lea.vmem [#allocation7], %s697
        // Predicated region
        $region37: #{tpu_custom_call.1} parent=27 // pred_check
          %p699 = pneg %p85
        $region38: #{tpu_custom_call.1} parent=27 // pred_check_branch
          %701 = sbr.rel (%p699) target = $region40
        $region39: #{tpu_custom_call.1} parent=27 // pred_region
          %s702 = smul.u32 32, %s20
          %s704 = ssub.s32 4096, 4096
          %705 = vsyncadd %s695, %s704
          %s706 = smul.addr %s702, 128
          %s707 = scalar_lea.hbm %s2, %s706
          %s708 = sshll.u32 %s698, 4
          %s709 = int_to_ptr.vmem [resolvable:$true] %s708
          %714 = dma.vmem_to_hbm [thread:$0]  %s709, 4096, %s707, %s695, 128, 128, 8
        $region40: #{tpu_custom_call.1} parent=27 // pred_fallthru
          _
      $region28: #{tpu_custom_call.1} parent=5 // pred_fallthru
        _
      %p715 = scmp.le.s32.totalorder 2, %s15
      // Predicated region
      $region41: #{tpu_custom_call.1} parent=5 // pred_check
        %p716 = pneg %p715
      $region42: #{tpu_custom_call.1} parent=5 // pred_check_branch
        %718 = sbr.rel (%p716) target = $region44
      $region43: #{tpu_custom_call.1} parent=5 // pred_region
        %s719 = ssub.s32 %s15, 2
        // Predicated region
        $region45: #{tpu_custom_call.1} parent=43 // pred_check
          %p720 = pneg %p91
        $region46: #{tpu_custom_call.1} parent=43 // pred_check_branch
          %722 = sbr.rel (%p720) target = $region48
        $region47: #{tpu_custom_call.1} parent=43 // pred_region
          %s723 = sand.u32 %s76, 1
          %s724 = scalar_lea.sflag [#allocation4], %s723
          %s725 = sand.u32 %s76, 1
          %s726 = smul.addr %s725, 256
          %s727 = scalar_lea.vmem [#allocation7], %s726
          %728 = dma.done %s724, 4096
        $region48: #{tpu_custom_call.1} parent=43 // pred_fallthru
          _
      $region44: #{tpu_custom_call.1} parent=5 // pred_fallthru
        _
    $region6: #{tpu_custom_call.1} parent=1 // loop_footer
      %s19 = sadd.s32 1, %s15
    $region7: #{tpu_custom_call.1} parent=1 // loop_footer_branch
      %14 = sbr.rel target = $region3
    $region8: #{tpu_custom_call.1} parent=1 // loop_exit
      _
    %729 = vsyncpa [#allocation3], 1
    %s730 = scalar_lea.sflag [#allocation3], 1
    %731 = vsyncpa %s730, 1
    %732 = vsyncpa [#allocation6], 1
    %733 = vsyncpa [#allocation4], 1
    %s734 = scalar_lea.sflag [#allocation4], 1
    %735 = vsyncpa %s734, 1

</llo_original>
